<compile_context>
chip_gen: v7x
topology: tpu7x:2x2x1
jax: 0.10.0
libtpu: 0.0.40
codegen_flags: <defaults>
</compile_context>

<pallas_src>
from functools import partial

import jax
import jax.numpy as jnp
from jax.experimental import pallas as pl
from jax.experimental.pallas import tpu as pltpu


def _erode_kernel(x_ref, o_ref, *, H, W, pad_val):
    x = x_ref[...]                                   # (TB, H*W), lane-dense block
    L = H * W
    neg = jnp.asarray(pad_val, dtype=x.dtype)

    # O(L) boundary masks: (1, L) iota + compares, broadcast inside jnp.where.
    pos = jax.lax.broadcasted_iota(jnp.int32, (1, L), 1)      # fused index h*W + w
    col = (pos & (W - 1)) if (W & (W - 1)) == 0 else (pos % W)
    m_right = col == (W - 1)                                   # last column
    m_left = col == 0                                          # first column
    m_bot = pos >= (H - 1) * W                                 # last row
    m_top = pos < W                                            # first row

    # --- 3-wide max along W: +/-1 lane rolls inside the fused axis ---
    # pltpu.roll follows jnp.roll semantics: result[p] = x[(p - shift) % L].
    m = jnp.maximum(x, jnp.where(m_right, neg, pltpu.roll(x, shift=L - 1, axis=1)))
    m = jnp.maximum(m, jnp.where(m_left, neg, pltpu.roll(x, shift=1, axis=1)))

    # --- 3-tall max along H: +/-W lane rolls of the horizontal max ---
    out = jnp.maximum(m, jnp.where(m_bot, neg, pltpu.roll(m, shift=L - W, axis=1)))
    out = jnp.maximum(out, jnp.where(m_top, neg, pltpu.roll(m, shift=W, axis=1)))
    o_ref[...] = out


def _budgets():
    """Return (per-block byte budget, vmem_limit_bytes) tuned per chip."""
    small_vmem = False
    try:
        small_vmem = pltpu.get_tpu_info().vmem_capacity_bytes <= 64 * 1024 * 1024
    except Exception:
        try:
            small_vmem = "v7" in jax.devices()[0].device_kind.lower()
        except Exception:
            small_vmem = False
    if small_vmem:
        # v7x-class: 64 MiB physical VMEM per TC, very high HBM BW.
        return 2 * 1024 * 1024, 48 * 1024 * 1024
    # v5e / v6e: 128 MiB VMEM, lower HBM BW -> bigger blocks amortize per-step cost.
    return 6 * 1024 * 1024, 96 * 1024 * 1024


def erode(x):
    """x: (N, C, D, H, W) -> same shape; MaxPool3d((1,3,3), stride 1, pad (0,1,1))."""
    N, C, D, H, W = x.shape
    M = N * C * D
    L = H * W
    itemsize = jnp.dtype(x.dtype).itemsize

    # Padding value: -inf for ordinary floats, finfo.min for finite-only float8,
    # iinfo.min for integers (matches PyTorch max-pool identity element).
    if jnp.issubdtype(x.dtype, jnp.floating):
        if "float8" in jnp.dtype(x.dtype).name:
            pad_val = float(jnp.finfo(x.dtype).min)
        else:
            pad_val = float("-inf")
    else:
        pad_val = int(jnp.iinfo(x.dtype).min)

    xf = x.reshape(M, L)                 # contiguity-preserving, no data movement

    # Dtype-aware sublane multiple: 8 (f32), 16 (bf16/f16), 32 (int8/fp8).
    sm = max(8, 32 // itemsize)
    block_bytes, vmem_limit = _budgets()
    row_bytes = L * itemsize

    if M <= sm:
        TB = M                            # full-extent block (grid of 1)
    else:
        TB = (block_bytes // row_bytes) // sm * sm
        TB = max(sm, min(TB, (M // sm) * sm))
        # Guarantee >= 2 grid steps when possible so the "parallel" axis can
        # shard across v7x's two TensorCores (free on single-TC v5e/v6e).
        if pl.cdiv(M, TB) < 2 and M >= 2 * sm:
            TB = max(sm, ((M // 2) // sm) * sm)
        # TODO(synk): for very large H*W slices (a single sm-row block no longer
        # fits the VMEM budget), tile H with a 1-row halo instead of batching
        # whole (H*W) slices.
    # TODO(synk): if H*W % 128 != 0 (e.g. 14x14), pad W in the wrapper so the
    # fused axis becomes a 128 multiple (lane-dense stores), slicing afterwards.

    grid = (pl.cdiv(M, TB),)              # ragged last block: rows are independent,
                                          # Pallas masks the out-of-range writeback.
    kernel = partial(_erode_kernel, H=H, W=W, pad_val=pad_val)

    out = pl.pallas_call(
        kernel,
        out_shape=jax.ShapeDtypeStruct((M, L), x.dtype),
        grid_spec=pltpu.PrefetchScalarGridSpec(
            num_scalar_prefetch=0,
            grid=grid,
            in_specs=[pl.BlockSpec((TB, L), lambda i: (i, 0))],
            out_specs=pl.BlockSpec((TB, L), lambda i: (i, 0)),
        ),
        compiler_params=pltpu.CompilerParams(
            dimension_semantics=("parallel",),
            vmem_limit_bytes=vmem_limit,
        ),
        cost_estimate=pl.CostEstimate(
            flops=4 * M * L,
            transcendentals=0,
            bytes_accessed=2 * M * L * itemsize,
        ),
    )(xf)

    return out.reshape(N, C, D, H, W)


def _erode_reference(x):
    """Pure-JAX reference (reduce_window) for validation."""
    return jax.lax.reduce_window(
        x, -jnp.inf, jax.lax.max,
        window_dimensions=(1, 1, 1, 3, 3),
        window_strides=(1, 1, 1, 1, 1),
        padding=((0, 0), (0, 0), (0, 0), (1, 1), (1, 1)),
    )


if __name__ == "__main__":
    key = jax.random.PRNGKey(0)
    N, C, D, H, W = 2, 4, 3, 16, 16
    x = jax.random.normal(key, (N, C, D, H, W), dtype=jnp.float32)

    y = erode(x)
    jax.block_until_ready(y)

    y_ref = _erode_reference(x)
    assert y.shape == x.shape
    assert jnp.allclose(y, y_ref), "mismatch vs reference max-pool"

    print("KERNEL_OK")
</pallas_src>

<mosaic_0001>
module attributes {stable_mosaic.version = 11 : i64} {
  func.func @_erode_kernel(%arg0: i32, %arg1: memref<8x256xf32, #tpu.memory_space<vmem>>, %arg2: memref<8x256xf32, #tpu.memory_space<vmem>>) attributes {dimension_semantics = [#tpu.dimension_semantics<parallel>], iteration_bounds = array<i64: 3>, scalar_prefetch = 0 : i64, scratch_operands = 0 : i64, tpu.core_type = #tpu.core_type<tc>, window_params = [{transform_indices = @transform_0, window_bounds = array<i64: 8, 256>}, {transform_indices = @transform_1, window_bounds = array<i64: 8, 256>}]} {
    %c0 = arith.constant 0 : index
    %c0_0 = arith.constant 0 : index
    %0 = vector.load %arg1[%c0, %c0_0] : memref<8x256xf32, #tpu.memory_space<vmem>>, vector<8x256xf32>
    %1 = tpu.iota {dimensions = array<i32: 1>} : vector<1x256xi32>
    %c15_i32 = arith.constant 15 : i32
    %2 = vector.broadcast %c15_i32 : i32 to vector<1x256xi32>
    %3 = arith.andi %1, %2 : vector<1x256xi32>
    %c15_i32_1 = arith.constant 15 : i32
    %4 = vector.broadcast %c15_i32_1 : i32 to vector<1x256xi32>
    %5 = arith.cmpi eq, %3, %4 : vector<1x256xi32>
    %c0_i32 = arith.constant 0 : i32
    %6 = vector.broadcast %c0_i32 : i32 to vector<1x256xi32>
    %7 = arith.cmpi eq, %3, %6 : vector<1x256xi32>
    %c240_i32 = arith.constant 240 : i32
    %8 = vector.broadcast %c240_i32 : i32 to vector<1x256xi32>
    %9 = arith.cmpi sge, %1, %8 : vector<1x256xi32>
    %c16_i32 = arith.constant 16 : i32
    %10 = vector.broadcast %c16_i32 : i32 to vector<1x256xi32>
    %11 = arith.cmpi slt, %1, %10 : vector<1x256xi32>
    %c255_i32 = arith.constant 255 : i32
    %12 = tpu.dynamic_rotate %0 by %c255_i32 dim 1 : vector<8x256xf32>, i32 -> vector<8x256xf32>
    %cst = arith.constant 0xFF800000 : f32
    %13 = vector.shape_cast %5 : vector<1x256xi1> to vector<1x256xi1>
    %14 = vector.broadcast %13 : vector<1x256xi1> to vector<8x256xi1>
    %15 = vector.broadcast %cst : f32 to vector<8x256xf32>
    %16 = arith.select %14, %15, %12 : vector<8x256xi1>, vector<8x256xf32>
    %17 = arith.maximumf %0, %16 : vector<8x256xf32>
    %c1_i32 = arith.constant 1 : i32
    %18 = tpu.dynamic_rotate %0 by %c1_i32 dim 1 : vector<8x256xf32>, i32 -> vector<8x256xf32>
    %cst_2 = arith.constant 0xFF800000 : f32
    %19 = vector.shape_cast %7 : vector<1x256xi1> to vector<1x256xi1>
    %20 = vector.broadcast %19 : vector<1x256xi1> to vector<8x256xi1>
    %21 = vector.broadcast %cst_2 : f32 to vector<8x256xf32>
    %22 = arith.select %20, %21, %18 : vector<8x256xi1>, vector<8x256xf32>
    %23 = arith.maximumf %17, %22 : vector<8x256xf32>
    %c240_i32_3 = arith.constant 240 : i32
    %24 = tpu.dynamic_rotate %23 by %c240_i32_3 dim 1 : vector<8x256xf32>, i32 -> vector<8x256xf32>
    %cst_4 = arith.constant 0xFF800000 : f32
    %25 = vector.shape_cast %9 : vector<1x256xi1> to vector<1x256xi1>
    %26 = vector.broadcast %25 : vector<1x256xi1> to vector<8x256xi1>
    %27 = vector.broadcast %cst_4 : f32 to vector<8x256xf32>
    %28 = arith.select %26, %27, %24 : vector<8x256xi1>, vector<8x256xf32>
    %29 = arith.maximumf %23, %28 : vector<8x256xf32>
    %c16_i32_5 = arith.constant 16 : i32
    %30 = tpu.dynamic_rotate %23 by %c16_i32_5 dim 1 : vector<8x256xf32>, i32 -> vector<8x256xf32>
    %cst_6 = arith.constant 0xFF800000 : f32
    %31 = vector.shape_cast %11 : vector<1x256xi1> to vector<1x256xi1>
    %32 = vector.broadcast %31 : vector<1x256xi1> to vector<8x256xi1>
    %33 = vector.broadcast %cst_6 : f32 to vector<8x256xf32>
    %34 = arith.select %32, %33, %30 : vector<8x256xi1>, vector<8x256xf32>
    %35 = arith.maximumf %29, %34 : vector<8x256xf32>
    %c0_7 = arith.constant 0 : index
    %c0_8 = arith.constant 0 : index
    %36 = vector.load %arg2[%c0_7, %c0_8] : memref<8x256xf32, #tpu.memory_space<vmem>>, vector<8x256xf32>
    tpu.vector_store %arg2[%c0_7, %c0_8], %35 {strides = array<i32>} : memref<8x256xf32, #tpu.memory_space<vmem>>, vector<8x256xf32>,
    return
  }
  func.func @transform_0(%arg0: i32) -> (i32, i32) {
    %c0_i32 = arith.constant 0 : i32
    %c0_i32_0 = arith.constant 0 : i32
    return %arg0, %c0_i32 : i32, i32
  }
  func.func @transform_1(%arg0: i32) -> (i32, i32) {
    %c0_i32 = arith.constant 0 : i32
    %c0_i32_0 = arith.constant 0 : i32
    return %arg0, %c0_i32 : i32, i32
  }
}

</mosaic_0001>

<llo_original>
// kernel: tpu_custom_call.1
$region0: #{tpu_custom_call.1}
  #allocation0 [shape = 'u32[]', space=smem, size = 0x4, offset = 0x4, fixed_abs, tag = 'smem constant byte address 0x4 - core index']
  #allocation1 [shape = 'u32[144,128]{1,0:T(1,128)}', space=vmem, size = 0x12000, scoped, tag = 'internal scratch']
  %s0 = inlined_call_operand.hbm [shape: f32[24,256], index: 0, kind: input, shape index: {}]
  %s1 = inlined_call_operand.hbm [shape: f32[24,256], index: 1, kind: output, shape index: {}]
  %s2 = sld [smem:[#allocation0]]
  $region41: #{tpu_custom_call.1} parent=0
    _
  %s4 = ssub.s32 1, %s2
  %s5 = scalar_select 0, %s4, %s2
  $region1: #{tpu_custom_call.1} parent=0
    #allocation2 [shape = 'u8[16384]{0}', space=vmem, size = 0x4000, scoped, tag = 'input window, operand 0']
    #allocation3 [shape = 's32[2]{0}', space=sflag, size = 0x8, scoped, tag = 'scoped memory for tpu_custom_call.1']
    #allocation4 [shape = 's32[2]{0}', space=sflag, size = 0x8, scoped, tag = 'scoped memory for tpu_custom_call.1']
    #allocation5 [shape = 'u8[16384]{0}', space=vmem, size = 0x4000, scoped, tag = 'output window, operand 0']
    %6 = vsyncpa [#allocation3], 0
    %s7 = scalar_lea.sflag [#allocation3], 1
    %8 = vsyncpa %s7, 0
    %9 = vsyncpa [#allocation4], 0
    %s10 = scalar_lea.sflag [#allocation4], 1
    %11 = vsyncpa %s10, 0
    loop: start=0, step=1, limit=5
    $region2: #{tpu_custom_call.1} parent=1 // loop_pre_header
      _
    $region3: #{tpu_custom_call.1} parent=1 // loop_header
      %s13 = sphi 0, %s17
      %p14 = scmp.ge.s32.totalorder %s13, 5
      %s23 = sphi 0, %s25
      %s26 = sphi 0, %s23
      %s27 = sphi 0, %s26
      %s43 = sphi 0, %s27
      %s49 = sphi 0, %s51
      %s52 = sphi 0, %s49
      %s53 = sphi 0, %s52
      %s69 = sphi 0, %s53
    $region4: #{tpu_custom_call.1} parent=1 // loop_header_branch
      %16 = sbr.rel (%p14) target = $region8
    $region5: #{tpu_custom_call.1} parent=1 // loop_body
      %s18 = ssub.s32 %s13, 1
      %s19 = ssub.s32 %s13, 2
      %s20 = sadd.s32 %s13, 1
      %s21 = ssub.s32 %s13, %s20
      %p22 = scmp.eq.s32.totalorder %s21, 0
      %s24 = sadd.s32 %s23, 1
      %s25 = scalar_select %p22, %s23, %s24
      %p28 = pneg %p22
      %p29 = scmp.eq.s32.totalorder %s13, 2
      %p30 = por %p28, %p29
      %p31 = scmp.ne.s32.totalorder %s23, %s26
      %p32 = scmp.eq.s32.totalorder %s13, 0
      %p33 = por %p31, %p32
      %p34 = scmp.ne.s32.totalorder %s23, %s26
      %p35 = scmp.eq.s32.totalorder %s18, 2
      %p36 = por %p34, %p35
      %p37 = scmp.ne.s32.totalorder %s26, %s27
      %p38 = scmp.eq.s32.totalorder %s18, 0
      %p39 = por %p37, %p38
      %p40 = scmp.ne.s32.totalorder %s26, %s27
      %p41 = scmp.eq.s32.totalorder %s19, 2
      %p42 = por %p40, %p41
      %p44 = scmp.ne.s32.totalorder %s27, %s43
      %p45 = scmp.eq.s32.totalorder %s19, 0
      %p46 = por %p44, %p45
      %s47 = ssub.s32 %s13, %s20
      %p48 = scmp.eq.s32.totalorder %s47, 0
      %s50 = sadd.s32 %s49, 1
      %s51 = scalar_select %p48, %s49, %s50
      %p54 = pneg %p48
      %p55 = scmp.eq.s32.totalorder %s13, 2
      %p56 = por %p54, %p55
      %p57 = scmp.ne.s32.totalorder %s49, %s52
      %p58 = scmp.eq.s32.totalorder %s13, 0
      %p59 = por %p57, %p58
      %p60 = scmp.ne.s32.totalorder %s49, %s52
      %p61 = scmp.eq.s32.totalorder %s18, 2
      %p62 = por %p60, %p61
      %p63 = scmp.ne.s32.totalorder %s52, %s53
      %p64 = scmp.eq.s32.totalorder %s18, 0
      %p65 = por %p63, %p64
      %p66 = scmp.ne.s32.totalorder %s52, %s53
      %p67 = scmp.eq.s32.totalorder %s19, 2
      %p68 = por %p66, %p67
      %p70 = scmp.ne.s32.totalorder %s53, %s69
      %p71 = scmp.eq.s32.totalorder %s19, 0
      %p72 = por %p70, %p71
      %p73 = scmp.le.s32.totalorder 1, %s13
      %p74 = scmp.lt.s32.totalorder %s13, 4
      %p75 = pnand %p73, %p74
      %p76 = pneg %p75
      // Predicated region
      $region9: #{tpu_custom_call.1} parent=5 // pred_check
        _
      $region10: #{tpu_custom_call.1} parent=5 // pred_check_branch
        %78 = sbr.rel (%p75) target = $region12
      $region11: #{tpu_custom_call.1} parent=5 // pred_region
        %s79 = ssub.s32 %s13, 1
      $region12: #{tpu_custom_call.1} parent=5 // pred_fallthru
        _
      %p80 = scmp.lt.s32.totalorder %s13, 3
      // Predicated region
      $region13: #{tpu_custom_call.1} parent=5 // pred_check
        %p81 = pneg %p80
      $region14: #{tpu_custom_call.1} parent=5 // pred_check_branch
        %83 = sbr.rel (%p81) target = $region16
      $region15: #{tpu_custom_call.1} parent=5 // pred_region
        // Predicated region
        $region17: #{tpu_custom_call.1} parent=15 // pred_check
          %p84 = pneg %p33
        $region18: #{tpu_custom_call.1} parent=15 // pred_check_branch
          %86 = sbr.rel (%p84) target = $region20
        $region19: #{tpu_custom_call.1} parent=15 // pred_region
          %s87 = sand.u32 %s23, 1
          %s88 = scalar_lea.sflag [#allocation3], %s87
          %s89 = sand.u32 %s23, 1
          %s90 = smul.addr %s89, 16
          %s91 = scalar_lea.vmem [#allocation2], %s90
          %s93 = ssub.s32 256, 256
          %94 = vsyncadd %s88, %s93
          %s95 = smul.addr %s13, 2
          %s96 = smul.addr %s95, 128
          %s97 = scalar_lea.hbm %s0, %s96
          %s99 = sshll.u32 %s91, 4
          %s100 = int_to_ptr.vmem [resolvable:$true] %s99
          %102 = dma.hbm_to_vmem [thread:$0]  %s97, 256, %s100, %s88
        $region20: #{tpu_custom_call.1} parent=15 // pred_fallthru
          _
      $region16: #{tpu_custom_call.1} parent=5 // pred_fallthru
        _
      %p103 = scmp.le.s32.totalorder 1, %s13
      %p104 = scmp.lt.s32.totalorder %s13, 4
      %p105 = pnand %p103, %p104
      %p106 = pneg %p105
      // Predicated region
      $region21: #{tpu_custom_call.1} parent=5 // pred_check
        _
      $region22: #{tpu_custom_call.1} parent=5 // pred_check_branch
        %108 = sbr.rel (%p105) target = $region24
      $region23: #{tpu_custom_call.1} parent=5 // pred_region
        %s109 = ssub.s32 %s13, 1
        %s110 = sand.u32 %s26, 1
        %s111 = scalar_lea.sflag [#allocation3], %s110
        %s112 = sand.u32 %s26, 1
        %s113 = smul.addr %s112, 16
        %s114 = scalar_lea.vmem [#allocation2], %s113
        // Predicated region
        $region25: #{tpu_custom_call.1} parent=23 // pred_check
          %p115 = pneg %p39
        $region26: #{tpu_custom_call.1} parent=23 // pred_check_branch
          %117 = sbr.rel (%p115) target = $region28
        $region27: #{tpu_custom_call.1} parent=23 // pred_region
          %118 = dma.done %s111, 256
        $region28: #{tpu_custom_call.1} parent=23 // pred_fallthru
          _
        %s119 = sand.u32 %s26, 1
        %s120 = scalar_lea.sflag [#allocation3], %s119
        %s121 = sand.u32 %s26, 1
        %s122 = smul.addr %s121, 16
        %s123 = scalar_lea.vmem [#allocation2], %s122
        %p124 = pneg %p39
        %p125 = pneg %p36
        %p126 = pneg %p65
        %p127 = pneg %p62
        %s128 = sand.u32 %s52, 1
        %s129 = scalar_lea.sflag [#allocation4], %s128
        %s130 = sand.u32 %s52, 1
        %s131 = smul.addr %s130, 16
        %s132 = scalar_lea.vmem [#allocation5], %s131
        %v133 = vld [vmem:[%s114] sm:$0xff]
        %v134 = vld [vmem:[%s114 + $0x8] sm:$0xff]
        %v135 = vlaneseq
        %v136 = vand.u32 %v135, 127
        %v137 = vadd.s32 %v136, 128
        %v138 = vand.u32 %v136, 15
        %v139 = vand.u32 %v137, 15
        %vm140 = vcmp.eq.s32.totalorder %v138, 15
        %vm141 = vcmp.eq.s32.totalorder %v139, 15
        %vm142 = vcmp.eq.s32.totalorder %v138, 0
        %vm143 = vcmp.eq.s32.totalorder %v139, 0
        %vm144 = vcmp.ge.s32.totalorder %v136, 240
        %vm145 = vcmp.ge.s32.totalorder %v137, 240
        %vm146 = vcmp.lt.s32.totalorder %v136, 16
        %vm147 = vcmp.lt.s32.totalorder %v137, 16
        %148 = vrot.lane.b32.xlu0 %v133, 127
        %v149 = vpop.permute.xlu0 %148
        %150 = vrot.lane.b32.xlu0 %v134, 127
        %v151 = vpop.permute.xlu0 %150
        %vm152 = vcmp.lt.s32.totalorder %v136, 127
        %v153 = vsel %vm152, %v149, %v151
        %v154 = vsel %vm152, %v151, %v149
        %v155 = vsel %vm140, 1, 0
        %v156 = vsel %vm141, 1, 0
        %vm157 = vcmp.eq.s32.totalorder %v155, 1
        %vm158 = vcmp.eq.s32.totalorder %v156, 1
        %v159 = vsel %vm157, -inf, %v153
        %v160 = vsel %vm158, -inf, %v154
        %v161 = vmax.f32 %v133, %v159
        %v162 = vmax.f32 %v134, %v160
        %163 = vrot.lane.b32.xlu0 %v133, 1
        %v164 = vpop.permute.xlu0 %163
        %165 = vrot.lane.b32.xlu0 %v134, 1
        %v166 = vpop.permute.xlu0 %165
        %vm167 = vcmp.lt.s32.totalorder %v136, 1
        %v168 = vsel %vm167, %v164, %v166
        %v169 = vsel %vm167, %v166, %v164
        %v170 = vsel %vm142, 1, 0
        %v171 = vsel %vm143, 1, 0
        %vm172 = vcmp.eq.s32.totalorder %v170, 1
        %vm173 = vcmp.eq.s32.totalorder %v171, 1
        %v174 = vsel %vm172, -inf, %v169
        %v175 = vsel %vm173, -inf, %v168
        %v176 = vmax.f32 %v161, %v174
        %v177 = vmax.f32 %v162, %v175
        %178 = vrot.lane.b32.xlu0 %v176, 112
        %v179 = vpop.permute.xlu0 %178
        %180 = vrot.lane.b32.xlu0 %v177, 112
        %v181 = vpop.permute.xlu0 %180
        %vm182 = vcmp.lt.s32.totalorder %v136, 112
        %v183 = vsel %vm182, %v179, %v181
        %v184 = vsel %vm182, %v181, %v179
        %v185 = vsel %vm144, 1, 0
        %v186 = vsel %vm145, 1, 0
        %vm187 = vcmp.eq.s32.totalorder %v185, 1
        %vm188 = vcmp.eq.s32.totalorder %v186, 1
        %v189 = vsel %vm187, -inf, %v183
        %v190 = vsel %vm188, -inf, %v184
        %v191 = vmax.f32 %v176, %v189
        %v192 = vmax.f32 %v177, %v190
        %193 = vrot.lane.b32.xlu0 %v176, 16
        %v194 = vpop.permute.xlu0 %193
        %195 = vrot.lane.b32.xlu0 %v177, 16
        %v196 = vpop.permute.xlu0 %195
        %v197 = vsel %vm146, %v194, %v196
        %v198 = vsel %vm146, %v196, %v194
        %v199 = vsel %vm146, 1, 0
        %v200 = vsel %vm147, 1, 0
        %vm201 = vcmp.eq.s32.totalorder %v199, 1
        %vm202 = vcmp.eq.s32.totalorder %v200, 1
        %v203 = vsel %vm201, -inf, %v198
        %v204 = vsel %vm202, -inf, %v197
        %v205 = vmax.f32 %v191, %v203
        %v206 = vmax.f32 %v192, %v204
        %207 = vst [vmem:[%s132] sm:$0xff] %v205
        %208 = vst [vmem:[%s132 + $0x8] sm:$0xff] %v206
        %s209 = sand.u32 %s52, 1
        %s210 = scalar_lea.sflag [#allocation4], %s209
        %s211 = sand.u32 %s52, 1
        %s212 = smul.addr %s211, 16
        %s213 = scalar_lea.vmem [#allocation5], %s212
        // Predicated region
        $region29: #{tpu_custom_call.1} parent=23 // pred_check
          %p214 = pneg %p62
        $region30: #{tpu_custom_call.1} parent=23 // pred_check_branch
          %216 = sbr.rel (%p214) target = $region32
        $region31: #{tpu_custom_call.1} parent=23 // pred_region
          %s218 = ssub.s32 256, 256
          %219 = vsyncadd %s210, %s218
          %s220 = smul.addr %s18, 2
          %s221 = smul.addr %s220, 128
          %s222 = scalar_lea.hbm %s1, %s221
          %s224 = sshll.u32 %s213, 4
          %s225 = int_to_ptr.vmem [resolvable:$true] %s224
          %227 = dma.vmem_to_hbm [thread:$0]  %s225, 256, %s222, %s210
        $region32: #{tpu_custom_call.1} parent=23 // pred_fallthru
          _
      $region24: #{tpu_custom_call.1} parent=5 // pred_fallthru
        _
      %p228 = scmp.le.s32.totalorder 2, %s13
      // Predicated region
      $region33: #{tpu_custom_call.1} parent=5 // pred_check
        %p229 = pneg %p228
      $region34: #{tpu_custom_call.1} parent=5 // pred_check_branch
        %231 = sbr.rel (%p229) target = $region36
      $region35: #{tpu_custom_call.1} parent=5 // pred_region
        %s232 = ssub.s32 %s13, 2
        // Predicated region
        $region37: #{tpu_custom_call.1} parent=35 // pred_check
          %p233 = pneg %p68
        $region38: #{tpu_custom_call.1} parent=35 // pred_check_branch
          %235 = sbr.rel (%p233) target = $region40
        $region39: #{tpu_custom_call.1} parent=35 // pred_region
          %s236 = sand.u32 %s53, 1
          %s237 = scalar_lea.sflag [#allocation4], %s236
          %s238 = sand.u32 %s53, 1
          %s239 = smul.addr %s238, 16
          %s240 = scalar_lea.vmem [#allocation5], %s239
          %241 = dma.done %s237, 256
        $region40: #{tpu_custom_call.1} parent=35 // pred_fallthru
          _
      $region36: #{tpu_custom_call.1} parent=5 // pred_fallthru
        _
    $region6: #{tpu_custom_call.1} parent=1 // loop_footer
      %s17 = sadd.s32 1, %s13
    $region7: #{tpu_custom_call.1} parent=1 // loop_footer_branch
      %12 = sbr.rel target = $region3
    $region8: #{tpu_custom_call.1} parent=1 // loop_exit
      _
    %242 = vsyncpa [#allocation3], 1
    %s243 = scalar_lea.sflag [#allocation3], 1
    %244 = vsyncpa %s243, 1
    %245 = vsyncpa [#allocation4], 1
    %s246 = scalar_lea.sflag [#allocation4], 1
    %247 = vsyncpa %s246, 1

</llo_original>
